<compile_context>
chip_gen: v7x
topology: tpu7x:2x2x1
jax: 0.10.0
libtpu: 0.0.40
codegen_flags: <defaults>
</compile_context>

<pallas_src>
import jax
import jax.numpy as jnp
from jax.experimental import pallas as pl
from jax.experimental.pallas import tpu as pltpu


def _round_up(n, m):
    return ((n + m - 1) // m) * m


def _linverse_kernel(x_ref,
                     w0_ref, b0_ref,
                     w1_ref, b1_ref,
                     w2_ref, b2_ref,
                     w3z1_ref, b3z1_ref,
                     w3z2_ref, b3z2_ref,
                     out_ref):
    # Matmul-operand dtype (bf16 on the fast path, f32 on the exact path).
    cdt = w0_ref.dtype

    x = x_ref[...]

    # Linear(nROI, nROI) ; LeakyReLU(0.2)
    h = jnp.dot(x, w0_ref[...], preferred_element_type=jnp.float32) + b0_ref[...]
    h = jnp.where(h > 0, h, 0.2 * h)                      # f32 elementwise
    # Linear(nROI, nROI//2) ; LeakyReLU(0.2)
    h = jnp.dot(h.astype(cdt), w1_ref[...],
                preferred_element_type=jnp.float32) + b1_ref[...]
    h = jnp.where(h > 0, h, 0.2 * h)
    # Linear(nROI//2, nROI//4) ; LeakyReLU(0.2)
    h = jnp.dot(h.astype(cdt), w2_ref[...],
                preferred_element_type=jnp.float32) + b2_ref[...]
    h = jnp.where(h > 0, h, 0.2 * h)

    # Head Linear(nROI//4, nCluster + nLatent), split in the wrapper so that
    # z1 / z2 come out lane-contiguous (no unaligned in-kernel lane slice).
    hc = h.astype(cdt)
    z1 = jnp.dot(hc, w3z1_ref[...],
                 preferred_element_type=jnp.float32) + b3z1_ref[...]
    z2 = jnp.dot(hc, w3z2_ref[...],
                 preferred_element_type=jnp.float32) + b3z2_ref[...]

    # softmax(z1, dim=1) with max-subtraction (matches F.softmax).
    # Exact division: the approx EUP reciprocal made sum(softmax) miss 1.0 by
    # more than 1e-3; the head is only nCluster lanes wide so exactness is free.
    m = jnp.max(z1, axis=1, keepdims=True)
    e = jnp.exp(z1 - m)
    denom = jnp.sum(e, axis=1, keepdims=True)
    z1_softmax = e / denom

    # Single lane-dense store: [z1_softmax | z1 | z2].
    out_ref[...] = jnp.concatenate([z1_softmax, z1, z2], axis=1)


def linverse_forward(x, params, ncluster, nlatent, *,
                     block_b=512, compute_dtype=jnp.bfloat16):
    """x: [B, nROI] float32.  params: dict of pre-transposed weights/biases.

    Returns (z1_softmax, z1, z2), matching the PyTorch module.
    """
    B, nroi = x.shape
    out_dim = 2 * ncluster + nlatent

    # Batch tile: multiple of 8 (f32 sublane); pad B up so every tile is full.
    tb = min(block_b, _round_up(B, 8))
    tb = _round_up(tb, 8)
    b_pad = _round_up(B, tb)
    if b_pad != B:
        x = jnp.pad(x, ((0, b_pad - B), (0, 0)))

    # Cast only the matmul operands (x + weights); biases / elementwise stay f32.
    xc = x.astype(compute_dtype)
    w0 = params["w0"].astype(compute_dtype); b0 = params["b0"]
    w1 = params["w1"].astype(compute_dtype); b1 = params["b1"]
    w2 = params["w2"].astype(compute_dtype); b2 = params["b2"]
    # Split the head: z2 = first nlatent cols, z1 = remaining ncluster cols.
    w3 = params["w3"]; b3 = params["b3"]
    w3_z2 = w3[:, :nlatent].astype(compute_dtype)
    w3_z1 = w3[:, nlatent:].astype(compute_dtype)
    b3_z2 = b3[:, :nlatent]
    b3_z1 = b3[:, nlatent:]

    def resident(arr):
        nd = arr.ndim
        return pl.BlockSpec(arr.shape, lambda i, _nd=nd: (0,) * _nd)

    in_specs = [
        pl.BlockSpec((tb, nroi), lambda i: (i, 0)),   # x: streamed per batch tile
        resident(w0), resident(b0),
        resident(w1), resident(b1),
        resident(w2), resident(b2),
        resident(w3_z1), resident(b3_z1),
        resident(w3_z2), resident(b3_z2),
    ]
    out_spec = pl.BlockSpec((tb, out_dim), lambda i: (i, 0))

    args = (xc, w0, b0, w1, b1, w2, b2, w3_z1, b3_z1, w3_z2, b3_z2)

    flops = 2 * b_pad * (nroi * nroi
                         + nroi * (nroi // 2)
                         + (nroi // 2) * (nroi // 4)
                         + (nroi // 4) * (ncluster + nlatent))
    bytes_accessed = (sum(int(a.size) * int(a.dtype.itemsize) for a in args)
                      + b_pad * out_dim * 4)
    cost = pl.CostEstimate(flops=int(flops),
                           transcendentals=int(b_pad * ncluster),
                           bytes_accessed=int(bytes_accessed))

    # NOTE: at tb<=512 the VMEM footprint (double-buffered x tile + resident
    # weights + output tile) is far below the scoped VMEM default on all chips;
    # if tb is pushed much larger, add vmem_limit_bytes to CompilerParams.
    fused = pl.pallas_call(
        _linverse_kernel,
        out_shape=jax.ShapeDtypeStruct((b_pad, out_dim), jnp.float32),
        grid=(b_pad // tb,),
        in_specs=in_specs,
        out_specs=out_spec,
        compiler_params=pltpu.CompilerParams(
            dimension_semantics=("parallel",)),
        cost_estimate=cost,
    )(*args)

    fused = fused[:B]
    z1_softmax = fused[:, :ncluster]
    z1 = fused[:, ncluster:2 * ncluster]
    z2 = fused[:, 2 * ncluster:]
    return z1_softmax, z1, z2


def init_params(key, nroi, ncluster, nlatent):
    """Deterministic synthetic init.  Weights stored as [in, out] (pre-transposed
    relative to PyTorch's [out, in] nn.Linear convention)."""
    dims = [(nroi, nroi),
            (nroi, nroi // 2),
            (nroi // 2, nroi // 4),
            (nroi // 4, ncluster + nlatent)]
    params = {}
    for i, (d_in, d_out) in enumerate(dims):
        key, kw, kb = jax.random.split(key, 3)
        bound = 1.0 / (d_in ** 0.5)
        params[f"w{i}"] = jax.random.uniform(
            kw, (d_in, d_out), jnp.float32, minval=-bound, maxval=bound)
        params[f"b{i}"] = jax.random.uniform(
            kb, (1, d_out), jnp.float32, minval=-bound, maxval=bound)
    return params


def reference_forward(x, params, ncluster, nlatent):
    """Pure-JAX f32 reference matching the PyTorch module semantics."""
    h = x @ params["w0"] + params["b0"]
    h = jnp.where(h > 0, h, 0.2 * h)
    h = h @ params["w1"] + params["b1"]
    h = jnp.where(h > 0, h, 0.2 * h)
    h = h @ params["w2"] + params["b2"]
    h = jnp.where(h > 0, h, 0.2 * h)
    z = h @ params["w3"] + params["b3"]
    z2 = z[:, :nlatent]
    z1 = z[:, nlatent:]
    return jax.nn.softmax(z1, axis=1), z1, z2


if __name__ == "__main__":
    B = 8          # batch
    nROI = 32      # -> hidden dims 32, 16, 8
    nCluster = 4
    nLatent = 4    # head output dim = nCluster + nLatent = 8

    key = jax.random.PRNGKey(0)
    key, kx = jax.random.split(key)
    x = jax.random.normal(kx, (B, nROI), jnp.float32)
    params = init_params(key, nROI, nCluster, nLatent)

    r_soft, r_z1, r_z2 = reference_forward(x, params, nCluster, nLatent)

    # Exact path (f32 matmul operands): tight check of the kernel structure.
    z1s_f, z1_f, z2_f = linverse_forward(x, params, nCluster, nLatent,
                                         compute_dtype=jnp.float32)
    jax.block_until_ready((z1s_f, z1_f, z2_f))
    assert jnp.allclose(z1_f, r_z1, atol=1e-5), "z1 mismatch (f32 path)"
    assert jnp.allclose(z2_f, r_z2, atol=1e-5), "z2 mismatch (f32 path)"
    assert jnp.allclose(z1s_f, r_soft, atol=1e-3), "z1_softmax mismatch (f32 path)"
    assert jnp.allclose(jnp.sum(z1s_f, axis=1), 1.0, atol=1e-4), "softmax sum (f32 path)"

    # Performance path (bf16 streaming of x + weights, f32 accumulation).
    z1_softmax, z1, z2 = linverse_forward(x, params, nCluster, nLatent)
    jax.block_until_ready((z1_softmax, z1, z2))
    assert jnp.allclose(z1, r_z1, atol=1e-1), "z1 mismatch (bf16 path)"
    assert jnp.allclose(z2, r_z2, atol=1e-1), "z2 mismatch (bf16 path)"
    assert jnp.allclose(z1_softmax, r_soft, atol=5e-2), "z1_softmax mismatch (bf16 path)"
    assert jnp.allclose(jnp.sum(z1_softmax, axis=1), 1.0, atol=1e-3), "softmax sum (bf16 path)"

    print("KERNEL_OK")
</pallas_src>

<mosaic_0001>
module attributes {stable_mosaic.version = 11 : i64} {
  func.func @_linverse_kernel(%arg0: i32, %arg1: memref<8x32xf32, #tpu.memory_space<vmem>>, %arg2: memref<32x32xf32, #tpu.memory_space<vmem>>, %arg3: memref<1x32xf32, #tpu.memory_space<vmem>>, %arg4: memref<32x16xf32, #tpu.memory_space<vmem>>, %arg5: memref<1x16xf32, #tpu.memory_space<vmem>>, %arg6: memref<16x8xf32, #tpu.memory_space<vmem>>, %arg7: memref<1x8xf32, #tpu.memory_space<vmem>>, %arg8: memref<8x4xf32, #tpu.memory_space<vmem>>, %arg9: memref<1x4xf32, #tpu.memory_space<vmem>>, %arg10: memref<8x4xf32, #tpu.memory_space<vmem>>, %arg11: memref<1x4xf32, #tpu.memory_space<vmem>>, %arg12: memref<8x12xf32, #tpu.memory_space<vmem>>) attributes {dimension_semantics = [#tpu.dimension_semantics<parallel>], iteration_bounds = array<i64: 1>, scalar_prefetch = 0 : i64, scratch_operands = 0 : i64, tpu.core_type = #tpu.core_type<tc>, window_params = [{transform_indices = @transform_0, window_bounds = array<i64: 8, 32>}, {pipeline_mode = #tpu.pipeline_mode<synchronous>, transform_indices = @transform_1, window_bounds = array<i64: 32, 32>}, {pipeline_mode = #tpu.pipeline_mode<synchronous>, transform_indices = @transform_2, window_bounds = array<i64: 1, 32>}, {pipeline_mode = #tpu.pipeline_mode<synchronous>, transform_indices = @transform_3, window_bounds = array<i64: 32, 16>}, {pipeline_mode = #tpu.pipeline_mode<synchronous>, transform_indices = @transform_4, window_bounds = array<i64: 1, 16>}, {pipeline_mode = #tpu.pipeline_mode<synchronous>, transform_indices = @transform_5, window_bounds = array<i64: 16, 8>}, {pipeline_mode = #tpu.pipeline_mode<synchronous>, transform_indices = @transform_6, window_bounds = array<i64: 1, 8>}, {pipeline_mode = #tpu.pipeline_mode<synchronous>, transform_indices = @transform_7, window_bounds = array<i64: 8, 4>}, {pipeline_mode = #tpu.pipeline_mode<synchronous>, transform_indices = @transform_8, window_bounds = array<i64: 1, 4>}, {pipeline_mode = #tpu.pipeline_mode<synchronous>, transform_indices = @transform_9, window_bounds = array<i64: 8, 4>}, {pipeline_mode = #tpu.pipeline_mode<synchronous>, transform_indices = @transform_10, window_bounds = array<i64: 1, 4>}, {transform_indices = @transform_11, window_bounds = array<i64: 8, 12>}]} {
    %c0 = arith.constant 0 : index
    %c0_0 = arith.constant 0 : index
    %0 = vector.load %arg1[%c0, %c0_0] : memref<8x32xf32, #tpu.memory_space<vmem>>, vector<8x32xf32>
    %c0_1 = arith.constant 0 : index
    %c0_2 = arith.constant 0 : index
    %1 = vector.load %arg2[%c0_1, %c0_2] : memref<32x32xf32, #tpu.memory_space<vmem>>, vector<32x32xf32>
    %cst = arith.constant dense<0.000000e+00> : vector<8x32xf32>
    %2 = tpu.matmul %0, %1, %cst {dimension_numbers = #tpu.dot_dimension_numbers<[1], [0], [0], [1], [0, 0, 1, 1], [], []>} : vector<8x32xf32>, vector<32x32xf32>, vector<8x32xf32> -> vector<8x32xf32>
    %c0_3 = arith.constant 0 : index
    %c0_4 = arith.constant 0 : index
    %3 = vector.load %arg3[%c0_3, %c0_4] : memref<1x32xf32, #tpu.memory_space<vmem>>, vector<1x32xf32>
    %4 = vector.broadcast %3 : vector<1x32xf32> to vector<8x32xf32>
    %5 = arith.addf %2, %4 : vector<8x32xf32>
    %cst_5 = arith.constant 0.000000e+00 : f32
    %6 = vector.broadcast %cst_5 : f32 to vector<8x32xf32>
    %7 = arith.cmpf ogt, %5, %6 : vector<8x32xf32>
    %cst_6 = arith.constant 2.000000e-01 : f32
    %8 = vector.broadcast %cst_6 : f32 to vector<8x32xf32>
    %9 = arith.mulf %8, %5 : vector<8x32xf32>
    %10 = arith.select %7, %5, %9 : vector<8x32xi1>, vector<8x32xf32>
    %c0_7 = arith.constant 0 : index
    %c0_8 = arith.constant 0 : index
    %11 = vector.load %arg4[%c0_7, %c0_8] : memref<32x16xf32, #tpu.memory_space<vmem>>, vector<32x16xf32>
    %cst_9 = arith.constant dense<0.000000e+00> : vector<8x16xf32>
    %12 = tpu.matmul %10, %11, %cst_9 {dimension_numbers = #tpu.dot_dimension_numbers<[1], [0], [0], [1], [0, 0, 1, 1], [], []>} : vector<8x32xf32>, vector<32x16xf32>, vector<8x16xf32> -> vector<8x16xf32>
    %c0_10 = arith.constant 0 : index
    %c0_11 = arith.constant 0 : index
    %13 = vector.load %arg5[%c0_10, %c0_11] : memref<1x16xf32, #tpu.memory_space<vmem>>, vector<1x16xf32>
    %14 = vector.broadcast %13 : vector<1x16xf32> to vector<8x16xf32>
    %15 = arith.addf %12, %14 : vector<8x16xf32>
    %cst_12 = arith.constant 0.000000e+00 : f32
    %16 = vector.broadcast %cst_12 : f32 to vector<8x16xf32>
    %17 = arith.cmpf ogt, %15, %16 : vector<8x16xf32>
    %cst_13 = arith.constant 2.000000e-01 : f32
    %18 = vector.broadcast %cst_13 : f32 to vector<8x16xf32>
    %19 = arith.mulf %18, %15 : vector<8x16xf32>
    %20 = arith.select %17, %15, %19 : vector<8x16xi1>, vector<8x16xf32>
    %c0_14 = arith.constant 0 : index
    %c0_15 = arith.constant 0 : index
    %21 = vector.load %arg6[%c0_14, %c0_15] : memref<16x8xf32, #tpu.memory_space<vmem>>, vector<16x8xf32>
    %cst_16 = arith.constant dense<0.000000e+00> : vector<8x8xf32>
    %22 = tpu.matmul %20, %21, %cst_16 {dimension_numbers = #tpu.dot_dimension_numbers<[1], [0], [0], [1], [0, 0, 1, 1], [], []>} : vector<8x16xf32>, vector<16x8xf32>, vector<8x8xf32> -> vector<8x8xf32>
    %c0_17 = arith.constant 0 : index
    %c0_18 = arith.constant 0 : index
    %23 = vector.load %arg7[%c0_17, %c0_18] : memref<1x8xf32, #tpu.memory_space<vmem>>, vector<1x8xf32>
    %24 = vector.broadcast %23 : vector<1x8xf32> to vector<8x8xf32>
    %25 = arith.addf %22, %24 : vector<8x8xf32>
    %cst_19 = arith.constant 0.000000e+00 : f32
    %26 = vector.broadcast %cst_19 : f32 to vector<8x8xf32>
    %27 = arith.cmpf ogt, %25, %26 : vector<8x8xf32>
    %cst_20 = arith.constant 2.000000e-01 : f32
    %28 = vector.broadcast %cst_20 : f32 to vector<8x8xf32>
    %29 = arith.mulf %28, %25 : vector<8x8xf32>
    %30 = arith.select %27, %25, %29 : vector<8x8xi1>, vector<8x8xf32>
    %c0_21 = arith.constant 0 : index
    %c0_22 = arith.constant 0 : index
    %31 = vector.load %arg8[%c0_21, %c0_22] : memref<8x4xf32, #tpu.memory_space<vmem>>, vector<8x4xf32>
    %cst_23 = arith.constant dense<0.000000e+00> : vector<8x4xf32>
    %32 = tpu.matmul %30, %31, %cst_23 {dimension_numbers = #tpu.dot_dimension_numbers<[1], [0], [0], [1], [0, 0, 1, 1], [], []>} : vector<8x8xf32>, vector<8x4xf32>, vector<8x4xf32> -> vector<8x4xf32>
    %c0_24 = arith.constant 0 : index
    %c0_25 = arith.constant 0 : index
    %33 = vector.load %arg9[%c0_24, %c0_25] : memref<1x4xf32, #tpu.memory_space<vmem>>, vector<1x4xf32>
    %34 = vector.broadcast %33 : vector<1x4xf32> to vector<8x4xf32>
    %35 = arith.addf %32, %34 : vector<8x4xf32>
    %c0_26 = arith.constant 0 : index
    %c0_27 = arith.constant 0 : index
    %36 = vector.load %arg10[%c0_26, %c0_27] : memref<8x4xf32, #tpu.memory_space<vmem>>, vector<8x4xf32>
    %cst_28 = arith.constant dense<0.000000e+00> : vector<8x4xf32>
    %37 = tpu.matmul %30, %36, %cst_28 {dimension_numbers = #tpu.dot_dimension_numbers<[1], [0], [0], [1], [0, 0, 1, 1], [], []>} : vector<8x8xf32>, vector<8x4xf32>, vector<8x4xf32> -> vector<8x4xf32>
    %c0_29 = arith.constant 0 : index
    %c0_30 = arith.constant 0 : index
    %38 = vector.load %arg11[%c0_29, %c0_30] : memref<1x4xf32, #tpu.memory_space<vmem>>, vector<1x4xf32>
    %39 = vector.broadcast %38 : vector<1x4xf32> to vector<8x4xf32>
    %40 = arith.addf %37, %39 : vector<8x4xf32>
    %cst_31 = arith.constant dense<0xFF800000> : vector<8xf32>
    %41 = vector.multi_reduction <maximumf>, %35, %cst_31 [1] : vector<8x4xf32> to vector<8xf32>
    %42 = vector.shape_cast %41 : vector<8xf32> to vector<8x1xf32>
    %43 = vector.broadcast %42 : vector<8x1xf32> to vector<8x4xf32>
    %44 = arith.subf %35, %43 : vector<8x4xf32>
    %45 = math.exp %44 : vector<8x4xf32>
    %cst_32 = arith.constant dense<0.000000e+00> : vector<8xf32>
    %46 = vector.multi_reduction <add>, %45, %cst_32 [1] : vector<8x4xf32> to vector<8xf32>
    %47 = vector.shape_cast %46 : vector<8xf32> to vector<8x1xf32>
    %48 = vector.broadcast %47 : vector<8x1xf32> to vector<8x4xf32>
    %49 = arith.divf %45, %48 : vector<8x4xf32>
    %50 = tpu.concatenate %49, %35, %40 in 1 : vector<8x4xf32>, vector<8x4xf32>, vector<8x4xf32> -> vector<8x12xf32>
    %c0_33 = arith.constant 0 : index
    %c0_34 = arith.constant 0 : index
    %51 = vector.load %arg12[%c0_33, %c0_34] : memref<8x12xf32, #tpu.memory_space<vmem>>, vector<8x12xf32>
    tpu.vector_store %arg12[%c0_33, %c0_34], %50 {strides = array<i32>} : memref<8x12xf32, #tpu.memory_space<vmem>>, vector<8x12xf32>,
    return
  }
  func.func @transform_0(%arg0: i32) -> (i32, i32) {
    %c0_i32 = arith.constant 0 : i32
    %c0_i32_0 = arith.constant 0 : i32
    return %arg0, %c0_i32 : i32, i32
  }
  func.func @transform_1(%arg0: i32) -> (i32, i32) {
    %c0_i32 = arith.constant 0 : i32
    %c0_i32_0 = arith.constant 0 : i32
    %c0_i32_1 = arith.constant 0 : i32
    return %c0_i32, %c0_i32_0 : i32, i32
  }
  func.func @transform_2(%arg0: i32) -> (i32, i32) {
    %c0_i32 = arith.constant 0 : i32
    %c0_i32_0 = arith.constant 0 : i32
    %c0_i32_1 = arith.constant 0 : i32
    return %c0_i32, %c0_i32_0 : i32, i32
  }
  func.func @transform_3(%arg0: i32) -> (i32, i32) {
    %c0_i32 = arith.constant 0 : i32
    %c0_i32_0 = arith.constant 0 : i32
    %c0_i32_1 = arith.constant 0 : i32
    return %c0_i32, %c0_i32_0 : i32, i32
  }
  func.func @transform_4(%arg0: i32) -> (i32, i32) {
    %c0_i32 = arith.constant 0 : i32
    %c0_i32_0 = arith.constant 0 : i32
    %c0_i32_1 = arith.constant 0 : i32
    return %c0_i32, %c0_i32_0 : i32, i32
  }
  func.func @transform_5(%arg0: i32) -> (i32, i32) {
    %c0_i32 = arith.constant 0 : i32
    %c0_i32_0 = arith.constant 0 : i32
    %c0_i32_1 = arith.constant 0 : i32
    return %c0_i32, %c0_i32_0 : i32, i32
  }
  func.func @transform_6(%arg0: i32) -> (i32, i32) {
    %c0_i32 = arith.constant 0 : i32
    %c0_i32_0 = arith.constant 0 : i32
    %c0_i32_1 = arith.constant 0 : i32
    return %c0_i32, %c0_i32_0 : i32, i32
  }
  func.func @transform_7(%arg0: i32) -> (i32, i32) {
    %c0_i32 = arith.constant 0 : i32
    %c0_i32_0 = arith.constant 0 : i32
    %c0_i32_1 = arith.constant 0 : i32
    return %c0_i32, %c0_i32_0 : i32, i32
  }
  func.func @transform_8(%arg0: i32) -> (i32, i32) {
    %c0_i32 = arith.constant 0 : i32
    %c0_i32_0 = arith.constant 0 : i32
    %c0_i32_1 = arith.constant 0 : i32
    return %c0_i32, %c0_i32_0 : i32, i32
  }
  func.func @transform_9(%arg0: i32) -> (i32, i32) {
    %c0_i32 = arith.constant 0 : i32
    %c0_i32_0 = arith.constant 0 : i32
    %c0_i32_1 = arith.constant 0 : i32
    return %c0_i32, %c0_i32_0 : i32, i32
  }
  func.func @transform_10(%arg0: i32) -> (i32, i32) {
    %c0_i32 = arith.constant 0 : i32
    %c0_i32_0 = arith.constant 0 : i32
    %c0_i32_1 = arith.constant 0 : i32
    return %c0_i32, %c0_i32_0 : i32, i32
  }
  func.func @transform_11(%arg0: i32) -> (i32, i32) {
    %c0_i32 = arith.constant 0 : i32
    %c0_i32_0 = arith.constant 0 : i32
    return %arg0, %c0_i32 : i32, i32
  }
}

</mosaic_0001>

<llo_original>
// kernel: tpu_custom_call.1
$region0: #{tpu_custom_call.1}
  #allocation0 [shape = 'u32[]', space=smem, size = 0x4, offset = 0x4, fixed_abs, tag = 'smem constant byte address 0x4 - core index']
  #allocation1 [shape = 'u32[144,128]{1,0:T(1,128)}', space=vmem, size = 0x12000, scoped, tag = 'internal scratch']
  %s0 = inlined_call_operand.vmem [shape: f32[8,32], index: 0, kind: input, shape index: {}]
  %s1 = inlined_call_operand.vmem [shape: f32[32,32], index: 1, kind: input, shape index: {}]
  %s2 = inlined_call_operand.vmem [shape: f32[1,32], index: 2, kind: input, shape index: {}]
  %s3 = inlined_call_operand.vmem [shape: f32[32,16], index: 3, kind: input, shape index: {}]
  %s4 = inlined_call_operand.vmem [shape: f32[1,16], index: 4, kind: input, shape index: {}]
  %s5 = inlined_call_operand.vmem [shape: f32[16,8], index: 5, kind: input, shape index: {}]
  %s6 = inlined_call_operand.vmem [shape: f32[1,8], index: 6, kind: input, shape index: {}]
  %s7 = inlined_call_operand.vmem [shape: f32[8,4], index: 7, kind: input, shape index: {}]
  %s8 = inlined_call_operand.vmem [shape: f32[1,4], index: 8, kind: input, shape index: {}]
  %s9 = inlined_call_operand.vmem [shape: f32[8,4], index: 9, kind: input, shape index: {}]
  %s10 = inlined_call_operand.vmem [shape: f32[1,4], index: 10, kind: input, shape index: {}]
  %s11 = inlined_call_operand.hbm [shape: f32[8,12], index: 11, kind: output, shape index: {}]
  %s12 = sld [smem:[#allocation0]]
  $region54: #{tpu_custom_call.1} parent=0
    _
  %s14 = ssub.s32 1, %s12
  %s15 = scalar_select 0, %s14, %s12
  $region1: #{tpu_custom_call.1} parent=0
    #allocation2 [shape = 'u8[4096]{0}', space=vmem, size = 0x1000, scoped, tag = 'output window, operand 0, single buffered']
    #allocation3 [shape = 's32[1]{0}', space=sflag, size = 0x4, scoped, tag = 'scoped memory for tpu_custom_call.1']
    %16 = vsyncpa [#allocation3], 0
    // Predicated region
    $region2: #{tpu_custom_call.1} parent=1 // pred_check
      _
    $region3: #{tpu_custom_call.1} parent=1 // pred_check_branch
      %18 = sbr.rel (0) target = $region5
    $region4: #{tpu_custom_call.1} parent=1 // pred_region
      _
    $region5: #{tpu_custom_call.1} parent=1 // pred_fallthru
      _
    // Predicated region
    $region6: #{tpu_custom_call.1} parent=1 // pred_check
      _
    $region7: #{tpu_custom_call.1} parent=1 // pred_check_branch
      %20 = sbr.rel (0) target = $region9
    $region8: #{tpu_custom_call.1} parent=1 // pred_region
      _
    $region9: #{tpu_custom_call.1} parent=1 // pred_fallthru
      _
    // Predicated region
    $region10: #{tpu_custom_call.1} parent=1 // pred_check
      _
    $region11: #{tpu_custom_call.1} parent=1 // pred_check_branch
      %22 = sbr.rel (0) target = $region13
    $region12: #{tpu_custom_call.1} parent=1 // pred_region
      _
    $region13: #{tpu_custom_call.1} parent=1 // pred_fallthru
      _
    // Predicated region
    $region14: #{tpu_custom_call.1} parent=1 // pred_check
      _
    $region15: #{tpu_custom_call.1} parent=1 // pred_check_branch
      %24 = sbr.rel (0) target = $region17
    $region16: #{tpu_custom_call.1} parent=1 // pred_region
      _
    $region17: #{tpu_custom_call.1} parent=1 // pred_fallthru
      _
    // Predicated region
    $region18: #{tpu_custom_call.1} parent=1 // pred_check
      _
    $region19: #{tpu_custom_call.1} parent=1 // pred_check_branch
      %26 = sbr.rel (0) target = $region21
    $region20: #{tpu_custom_call.1} parent=1 // pred_region
      _
    $region21: #{tpu_custom_call.1} parent=1 // pred_fallthru
      _
    // Predicated region
    $region22: #{tpu_custom_call.1} parent=1 // pred_check
      _
    $region23: #{tpu_custom_call.1} parent=1 // pred_check_branch
      %28 = sbr.rel (0) target = $region25
    $region24: #{tpu_custom_call.1} parent=1 // pred_region
      _
    $region25: #{tpu_custom_call.1} parent=1 // pred_fallthru
      _
    // Predicated region
    $region26: #{tpu_custom_call.1} parent=1 // pred_check
      _
    $region27: #{tpu_custom_call.1} parent=1 // pred_check_branch
      %30 = sbr.rel (0) target = $region29
    $region28: #{tpu_custom_call.1} parent=1 // pred_region
      _
    $region29: #{tpu_custom_call.1} parent=1 // pred_fallthru
      _
    // Predicated region
    $region30: #{tpu_custom_call.1} parent=1 // pred_check
      _
    $region31: #{tpu_custom_call.1} parent=1 // pred_check_branch
      %32 = sbr.rel (0) target = $region33
    $region32: #{tpu_custom_call.1} parent=1 // pred_region
      _
    $region33: #{tpu_custom_call.1} parent=1 // pred_fallthru
      _
    // Predicated region
    $region34: #{tpu_custom_call.1} parent=1 // pred_check
      _
    $region35: #{tpu_custom_call.1} parent=1 // pred_check_branch
      %34 = sbr.rel (0) target = $region37
    $region36: #{tpu_custom_call.1} parent=1 // pred_region
      _
    $region37: #{tpu_custom_call.1} parent=1 // pred_fallthru
      _
    // Predicated region
    $region38: #{tpu_custom_call.1} parent=1 // pred_check
      _
    $region39: #{tpu_custom_call.1} parent=1 // pred_check_branch
      %36 = sbr.rel (0) target = $region41
    $region40: #{tpu_custom_call.1} parent=1 // pred_region
      _
    $region41: #{tpu_custom_call.1} parent=1 // pred_fallthru
      _
    // Predicated region
    $region42: #{tpu_custom_call.1} parent=1 // pred_check
      _
    $region43: #{tpu_custom_call.1} parent=1 // pred_check_branch
      %38 = sbr.rel (0) target = $region45
    $region44: #{tpu_custom_call.1} parent=1 // pred_region
      _
    $region45: #{tpu_custom_call.1} parent=1 // pred_fallthru
      _
    %v39 = vld [vmem:[%s0] sm:$0xff]
    %v40 = vld [vmem:[%s1] sm:$0xff]
    %v41 = vld [vmem:[%s1 + $0x8] sm:$0xff]
    %v42 = vld [vmem:[%s1 + $0x10] sm:$0xff]
    %v43 = vld [vmem:[%s1 + $0x18] sm:$0xff]
    %v44 = vld [vmem:[%s2] sm:$0x1]
    %v46 = vlaneseq
    %v47 = vshrl.u32 %v46, 7
    %v48 = vsub.s32 0, %v47
    %v49 = vrot.slane %v44, %v48
    %vm51 = vcmask 261120
    %v53 = vsel %vm51, %v39, 0
    %55 = vmatprep.subr.mxu0 0.0
    %56 = vmatpush1.msra.mxu0 %v40
    %57 = vmatprep.subr.mxu0 0.0
    %58 = vmatpush1.msra.mxu0 %v41
    %59 = vmatprep.subr.mxu0 0.0
    %60 = vmatpush1.msra.mxu0 %v42
    %61 = vmatprep.subr.mxu0 0.0
    %62 = vmatpush1.msra.mxu0 %v43
    %63 = vmatprep.subr.mxu0 0.0
    %64 = vmatpush1.msra.mxu0 0.0
    %65 = vmatprep.subr.mxu0 0.0
    %66 = vmatpush1.msra.mxu0 0.0
    %67 = vmatprep.subr.mxu0 0.0
    %68 = vmatpush1.msra.mxu0 0.0
    %69 = vmatprep.subr.mxu0 0.0
    %70 = vmatpush1.msra.mxu0 0.0
    %71 = vmatprep.subr.mxu0 0.0
    %72 = vmatpush1.msra.mxu0 0.0
    %73 = vmatprep.subr.mxu0 0.0
    %74 = vmatpush1.msra.mxu0 0.0
    %75 = vmatprep.subr.mxu0 0.0
    %76 = vmatpush1.msra.mxu0 0.0
    %77 = vmatprep.subr.mxu0 0.0
    %78 = vmatpush1.msra.mxu0 0.0
    %79 = vmatprep.subr.mxu0 0.0
    %80 = vmatpush1.msra.mxu0 0.0
    %81 = vmatprep.subr.mxu0 0.0
    %82 = vmatpush1.msra.mxu0 0.0
    %83 = vmatprep.subr.mxu0 0.0
    %84 = vmatpush1.msra.mxu0 0.0
    %85 = vmatprep.subr.mxu0 0.0
    %86 = vmatpush1.msra.mxu0 0.0
    %87 = vmatprep.subr.mxu0 0.0
    %88 = vmatpush1.msra.mxu0 0.0
    %89 = vmatprep.subr.mxu0 0.0
    %90 = vmatpush1.msra.mxu0 0.0
    %91 = vmatprep.subr.mxu0 0.0
    %92 = vmatpush1.msra.mxu0 0.0
    %93 = vmatprep.subr.mxu0 0.0
    %94 = vmatpush1.msra.mxu0 0.0
    %95 = vmatprep.subr.mxu0 0.0
    %96 = vmatpush1.msra.mxu0 0.0
    %97 = vmatprep.subr.mxu0 0.0
    %98 = vmatpush1.msra.mxu0 0.0
    %99 = vmatprep.subr.mxu0 0.0
    %100 = vmatpush1.msra.mxu0 0.0
    %101 = vmatprep.subr.mxu0 0.0
    %102 = vmatpush1.msra.mxu0 0.0
    %103 = vmatprep.subr.mxu0 0.0
    %104 = vmatpush1.msra.mxu0 0.0
    %105 = vmatprep.subr.mxu0 0.0
    %106 = vmatpush1.msra.mxu0 0.0
    %107 = vmatprep.subr.mxu0 0.0
    %108 = vmatpush1.msra.mxu0 0.0
    %109 = vmatprep.subr.mxu0 0.0
    %110 = vmatpush1.msra.mxu0 0.0
    %111 = vmatprep.subr.mxu0 0.0
    %112 = vmatpush1.msra.mxu0 0.0
    %113 = vmatprep.subr.mxu0 0.0
    %114 = vmatpush1.msra.mxu0 0.0
    %115 = vmatprep.subr.mxu0 0.0
    %116 = vmatpush1.msra.mxu0 0.0
    %117 = vmatprep.subr.mxu0 0.0
    %118 = vmatpush1.msra.mxu0 0.0
    %119 = vmatprep.mubr.f32.mxu0 0.0
    %120 = vmatmul.mubr.f32.gmra.mrb[0].mxu0 %v53
    %v121 = vpop.f32.mrb[0].mxu0
    %v122 = vadd.f32 %v49, %v121
    %v123 = vpop.f32.mrb[0].mxu0
    %124 = vdwg.mxu0
    %vm125 = vcmp.gt.f32.partialorder %v122, 0.0
    %v126 = vmul.f32 %v122, 0.2
    %v127 = vsel %vm125, %v122, %v126
    %v128 = vld [vmem:[%s3] sm:$0xff]
    %v129 = vld [vmem:[%s3 + $0x8] sm:$0xff]
    %v130 = vld [vmem:[%s3 + $0x10] sm:$0xff]
    %v131 = vld [vmem:[%s3 + $0x18] sm:$0xff]
    %v132 = vld [vmem:[%s4] sm:$0x1]
    %v134 = vlaneseq
    %v135 = vshrl.u32 %v134, 7
    %v136 = vsub.s32 0, %v135
    %v137 = vrot.slane %v132, %v136
    %v140 = vsel %vm51, %v127, 0
    %142 = vmatprep.subr.mxu0 0.0
    %143 = vmatpush1.msra.mxu0 %v128
    %144 = vmatprep.subr.mxu0 0.0
    %145 = vmatpush1.msra.mxu0 %v129
    %146 = vmatprep.subr.mxu0 0.0
    %147 = vmatpush1.msra.mxu0 %v130
    %148 = vmatprep.subr.mxu0 0.0
    %149 = vmatpush1.msra.mxu0 %v131
    %150 = vmatprep.subr.mxu0 0.0
    %151 = vmatpush1.msra.mxu0 0.0
    %152 = vmatprep.subr.mxu0 0.0
    %153 = vmatpush1.msra.mxu0 0.0
    %154 = vmatprep.subr.mxu0 0.0
    %155 = vmatpush1.msra.mxu0 0.0
    %156 = vmatprep.subr.mxu0 0.0
    %157 = vmatpush1.msra.mxu0 0.0
    %158 = vmatprep.subr.mxu0 0.0
    %159 = vmatpush1.msra.mxu0 0.0
    %160 = vmatprep.subr.mxu0 0.0
    %161 = vmatpush1.msra.mxu0 0.0
    %162 = vmatprep.subr.mxu0 0.0
    %163 = vmatpush1.msra.mxu0 0.0
    %164 = vmatprep.subr.mxu0 0.0
    %165 = vmatpush1.msra.mxu0 0.0
    %166 = vmatprep.subr.mxu0 0.0
    %167 = vmatpush1.msra.mxu0 0.0
    %168 = vmatprep.subr.mxu0 0.0
    %169 = vmatpush1.msra.mxu0 0.0
    %170 = vmatprep.subr.mxu0 0.0
    %171 = vmatpush1.msra.mxu0 0.0
    %172 = vmatprep.subr.mxu0 0.0
    %173 = vmatpush1.msra.mxu0 0.0
    %174 = vmatprep.subr.mxu0 0.0
    %175 = vmatpush1.msra.mxu0 0.0
    %176 = vmatprep.subr.mxu0 0.0
    %177 = vmatpush1.msra.mxu0 0.0
    %178 = vmatprep.subr.mxu0 0.0
    %179 = vmatpush1.msra.mxu0 0.0
    %180 = vmatprep.subr.mxu0 0.0
    %181 = vmatpush1.msra.mxu0 0.0
    %182 = vmatprep.subr.mxu0 0.0
    %183 = vmatpush1.msra.mxu0 0.0
    %184 = vmatprep.subr.mxu0 0.0
    %185 = vmatpush1.msra.mxu0 0.0
    %186 = vmatprep.subr.mxu0 0.0
    %187 = vmatpush1.msra.mxu0 0.0
    %188 = vmatprep.subr.mxu0 0.0
    %189 = vmatpush1.msra.mxu0 0.0
    %190 = vmatprep.subr.mxu0 0.0
    %191 = vmatpush1.msra.mxu0 0.0
    %192 = vmatprep.subr.mxu0 0.0
    %193 = vmatpush1.msra.mxu0 0.0
    %194 = vmatprep.subr.mxu0 0.0
    %195 = vmatpush1.msra.mxu0 0.0
    %196 = vmatprep.subr.mxu0 0.0
    %197 = vmatpush1.msra.mxu0 0.0
    %198 = vmatprep.subr.mxu0 0.0
    %199 = vmatpush1.msra.mxu0 0.0
    %200 = vmatprep.subr.mxu0 0.0
    %201 = vmatpush1.msra.mxu0 0.0
    %202 = vmatprep.subr.mxu0 0.0
    %203 = vmatpush1.msra.mxu0 0.0
    %204 = vmatprep.subr.mxu0 0.0
    %205 = vmatpush1.msra.mxu0 0.0
    %206 = vmatprep.mubr.f32.mxu0 0.0
    %207 = vmatmul.mubr.f32.gmra.mrb[0].mxu0 %v140
    %v208 = vpop.f32.mrb[0].mxu0
    %v209 = vadd.f32 %v137, %v208
    %v210 = vpop.f32.mrb[0].mxu0
    %211 = vdwg.mxu0
    %vm212 = vcmp.gt.f32.partialorder %v209, 0.0
    %v213 = vmul.f32 %v209, 0.2
    %v214 = vsel %vm212, %v209, %v213
    %v215 = vld [vmem:[%s5] sm:$0xff]
    %v216 = vld [vmem:[%s5 + $0x8] sm:$0xff]
    %v217 = vld [vmem:[%s6] sm:$0x1]
    %v219 = vlaneseq
    %v220 = vshrl.u32 %v219, 7
    %v221 = vsub.s32 0, %v220
    %v222 = vrot.slane %v217, %v221
    %vm224 = vcmask 130048
    %v226 = vsel %vm224, %v214, 0
    %228 = vmatprep.subr.mxu0 0.0
    %229 = vmatpush1.msra.mxu0 %v215
    %230 = vmatprep.subr.mxu0 0.0
    %231 = vmatpush1.msra.mxu0 %v216
    %232 = vmatprep.subr.mxu0 0.0
    %233 = vmatpush1.msra.mxu0 0.0
    %234 = vmatprep.subr.mxu0 0.0
    %235 = vmatpush1.msra.mxu0 0.0
    %236 = vmatprep.subr.mxu0 0.0
    %237 = vmatpush1.msra.mxu0 0.0
    %238 = vmatprep.subr.mxu0 0.0
    %239 = vmatpush1.msra.mxu0 0.0
    %240 = vmatprep.subr.mxu0 0.0
    %241 = vmatpush1.msra.mxu0 0.0
    %242 = vmatprep.subr.mxu0 0.0
    %243 = vmatpush1.msra.mxu0 0.0
    %244 = vmatprep.subr.mxu0 0.0
    %245 = vmatpush1.msra.mxu0 0.0
    %246 = vmatprep.subr.mxu0 0.0
    %247 = vmatpush1.msra.mxu0 0.0
    %248 = vmatprep.subr.mxu0 0.0
    %249 = vmatpush1.msra.mxu0 0.0
    %250 = vmatprep.subr.mxu0 0.0
    %251 = vmatpush1.msra.mxu0 0.0
    %252 = vmatprep.subr.mxu0 0.0
    %253 = vmatpush1.msra.mxu0 0.0
    %254 = vmatprep.subr.mxu0 0.0
    %255 = vmatpush1.msra.mxu0 0.0
    %256 = vmatprep.subr.mxu0 0.0
    %257 = vmatpush1.msra.mxu0 0.0
    %258 = vmatprep.subr.mxu0 0.0
    %259 = vmatpush1.msra.mxu0 0.0
    %260 = vmatprep.subr.mxu0 0.0
    %261 = vmatpush1.msra.mxu0 0.0
    %262 = vmatprep.subr.mxu0 0.0
    %263 = vmatpush1.msra.mxu0 0.0
    %264 = vmatprep.subr.mxu0 0.0
    %265 = vmatpush1.msra.mxu0 0.0
    %266 = vmatprep.subr.mxu0 0.0
    %267 = vmatpush1.msra.mxu0 0.0
    %268 = vmatprep.subr.mxu0 0.0
    %269 = vmatpush1.msra.mxu0 0.0
    %270 = vmatprep.subr.mxu0 0.0
    %271 = vmatpush1.msra.mxu0 0.0
    %272 = vmatprep.subr.mxu0 0.0
    %273 = vmatpush1.msra.mxu0 0.0
    %274 = vmatprep.subr.mxu0 0.0
    %275 = vmatpush1.msra.mxu0 0.0
    %276 = vmatprep.subr.mxu0 0.0
    %277 = vmatpush1.msra.mxu0 0.0
    %278 = vmatprep.subr.mxu0 0.0
    %279 = vmatpush1.msra.mxu0 0.0
    %280 = vmatprep.subr.mxu0 0.0
    %281 = vmatpush1.msra.mxu0 0.0
    %282 = vmatprep.subr.mxu0 0.0
    %283 = vmatpush1.msra.mxu0 0.0
    %284 = vmatprep.subr.mxu0 0.0
    %285 = vmatpush1.msra.mxu0 0.0
    %286 = vmatprep.subr.mxu0 0.0
    %287 = vmatpush1.msra.mxu0 0.0
    %288 = vmatprep.subr.mxu0 0.0
    %289 = vmatpush1.msra.mxu0 0.0
    %290 = vmatprep.subr.mxu0 0.0
    %291 = vmatpush1.msra.mxu0 0.0
    %292 = vmatprep.mubr.f32.mxu0 0.0
    %293 = vmatmul.mubr.f32.gmra.mrb[0].mxu0 %v226
    %v294 = vpop.f32.mrb[0].mxu0
    %v295 = vadd.f32 %v222, %v294
    %v296 = vpop.f32.mrb[0].mxu0
    %297 = vdwg.mxu0
    %vm298 = vcmp.gt.f32.partialorder %v295, 0.0
    %v299 = vmul.f32 %v295, 0.2
    %v300 = vsel %vm298, %v295, %v299
    %v301 = vld [vmem:[%s7] sm:$0xff]
    %v302 = vld [vmem:[%s8] sm:$0x1]
    %v304 = vlaneseq
    %v305 = vshrl.u32 %v304, 7
    %v306 = vsub.s32 0, %v305
    %v307 = vrot.slane %v302, %v306
    %vm309 = vcmask 64512
    %v311 = vsel %vm309, %v300, 0
    %313 = vmatprep.subr.mxu0 0.0
    %314 = vmatpush1.msra.mxu0 %v301
    %315 = vmatprep.subr.mxu0 0.0
    %316 = vmatpush1.msra.mxu0 0.0
    %317 = vmatprep.subr.mxu0 0.0
    %318 = vmatpush1.msra.mxu0 0.0
    %319 = vmatprep.subr.mxu0 0.0
    %320 = vmatpush1.msra.mxu0 0.0
    %321 = vmatprep.subr.mxu0 0.0
    %322 = vmatpush1.msra.mxu0 0.0
    %323 = vmatprep.subr.mxu0 0.0
    %324 = vmatpush1.msra.mxu0 0.0
    %325 = vmatprep.subr.mxu0 0.0
    %326 = vmatpush1.msra.mxu0 0.0
    %327 = vmatprep.subr.mxu0 0.0
    %328 = vmatpush1.msra.mxu0 0.0
    %329 = vmatprep.subr.mxu0 0.0
    %330 = vmatpush1.msra.mxu0 0.0
    %331 = vmatprep.subr.mxu0 0.0
    %332 = vmatpush1.msra.mxu0 0.0
    %333 = vmatprep.subr.mxu0 0.0
    %334 = vmatpush1.msra.mxu0 0.0
    %335 = vmatprep.subr.mxu0 0.0
    %336 = vmatpush1.msra.mxu0 0.0
    %337 = vmatprep.subr.mxu0 0.0
    %338 = vmatpush1.msra.mxu0 0.0
    %339 = vmatprep.subr.mxu0 0.0
    %340 = vmatpush1.msra.mxu0 0.0
    %341 = vmatprep.subr.mxu0 0.0
    %342 = vmatpush1.msra.mxu0 0.0
    %343 = vmatprep.subr.mxu0 0.0
    %344 = vmatpush1.msra.mxu0 0.0
    %345 = vmatprep.subr.mxu0 0.0
    %346 = vmatpush1.msra.mxu0 0.0
    %347 = vmatprep.subr.mxu0 0.0
    %348 = vmatpush1.msra.mxu0 0.0
    %349 = vmatprep.subr.mxu0 0.0
    %350 = vmatpush1.msra.mxu0 0.0
    %351 = vmatprep.subr.mxu0 0.0
    %352 = vmatpush1.msra.mxu0 0.0
    %353 = vmatprep.subr.mxu0 0.0
    %354 = vmatpush1.msra.mxu0 0.0
    %355 = vmatprep.subr.mxu0 0.0
    %356 = vmatpush1.msra.mxu0 0.0
    %357 = vmatprep.subr.mxu0 0.0
    %358 = vmatpush1.msra.mxu0 0.0
    %359 = vmatprep.subr.mxu0 0.0
    %360 = vmatpush1.msra.mxu0 0.0
    %361 = vmatprep.subr.mxu0 0.0
    %362 = vmatpush1.msra.mxu0 0.0
    %363 = vmatprep.subr.mxu0 0.0
    %364 = vmatpush1.msra.mxu0 0.0
    %365 = vmatprep.subr.mxu0 0.0
    %366 = vmatpush1.msra.mxu0 0.0
    %367 = vmatprep.subr.mxu0 0.0
    %368 = vmatpush1.msra.mxu0 0.0
    %369 = vmatprep.subr.mxu0 0.0
    %370 = vmatpush1.msra.mxu0 0.0
    %371 = vmatprep.subr.mxu0 0.0
    %372 = vmatpush1.msra.mxu0 0.0
    %373 = vmatprep.subr.mxu0 0.0
    %374 = vmatpush1.msra.mxu0 0.0
    %375 = vmatprep.subr.mxu0 0.0
    %376 = vmatpush1.msra.mxu0 0.0
    %377 = vmatprep.mubr.f32.mxu0 0.0
    %378 = vmatmul.mubr.f32.gmra.mrb[0].mxu0 %v311
    %v379 = vpop.f32.mrb[0].mxu0
    %v380 = vadd.f32 %v307, %v379
    %v381 = vpop.f32.mrb[0].mxu0
    %382 = vdwg.mxu0
    %v383 = vld [vmem:[%s9] sm:$0xff]
    %v384 = vld [vmem:[%s10] sm:$0x1]
    %v386 = vlaneseq
    %v387 = vshrl.u32 %v386, 7
    %v388 = vsub.s32 0, %v387
    %v389 = vrot.slane %v384, %v388
    %391 = vmatprep.subr.mxu0 0.0
    %392 = vmatpush1.msra.mxu0 %v383
    %393 = vmatprep.subr.mxu0 0.0
    %394 = vmatpush1.msra.mxu0 0.0
    %395 = vmatprep.subr.mxu0 0.0
    %396 = vmatpush1.msra.mxu0 0.0
    %397 = vmatprep.subr.mxu0 0.0
    %398 = vmatpush1.msra.mxu0 0.0
    %399 = vmatprep.subr.mxu0 0.0
    %400 = vmatpush1.msra.mxu0 0.0
    %401 = vmatprep.subr.mxu0 0.0
    %402 = vmatpush1.msra.mxu0 0.0
    %403 = vmatprep.subr.mxu0 0.0
    %404 = vmatpush1.msra.mxu0 0.0
    %405 = vmatprep.subr.mxu0 0.0
    %406 = vmatpush1.msra.mxu0 0.0
    %407 = vmatprep.subr.mxu0 0.0
    %408 = vmatpush1.msra.mxu0 0.0
    %409 = vmatprep.subr.mxu0 0.0
    %410 = vmatpush1.msra.mxu0 0.0
    %411 = vmatprep.subr.mxu0 0.0
    %412 = vmatpush1.msra.mxu0 0.0
    %413 = vmatprep.subr.mxu0 0.0
    %414 = vmatpush1.msra.mxu0 0.0
    %415 = vmatprep.subr.mxu0 0.0
    %416 = vmatpush1.msra.mxu0 0.0
    %417 = vmatprep.subr.mxu0 0.0
    %418 = vmatpush1.msra.mxu0 0.0
    %419 = vmatprep.subr.mxu0 0.0
    %420 = vmatpush1.msra.mxu0 0.0
    %421 = vmatprep.subr.mxu0 0.0
    %422 = vmatpush1.msra.mxu0 0.0
    %423 = vmatprep.subr.mxu0 0.0
    %424 = vmatpush1.msra.mxu0 0.0
    %425 = vmatprep.subr.mxu0 0.0
    %426 = vmatpush1.msra.mxu0 0.0
    %427 = vmatprep.subr.mxu0 0.0
    %428 = vmatpush1.msra.mxu0 0.0
    %429 = vmatprep.subr.mxu0 0.0
    %430 = vmatpush1.msra.mxu0 0.0
    %431 = vmatprep.subr.mxu0 0.0
    %432 = vmatpush1.msra.mxu0 0.0
    %433 = vmatprep.subr.mxu0 0.0
    %434 = vmatpush1.msra.mxu0 0.0
    %435 = vmatprep.subr.mxu0 0.0
    %436 = vmatpush1.msra.mxu0 0.0
    %437 = vmatprep.subr.mxu0 0.0
    %438 = vmatpush1.msra.mxu0 0.0
    %439 = vmatprep.subr.mxu0 0.0
    %440 = vmatpush1.msra.mxu0 0.0
    %441 = vmatprep.subr.mxu0 0.0
    %442 = vmatpush1.msra.mxu0 0.0
    %443 = vmatprep.subr.mxu0 0.0
    %444 = vmatpush1.msra.mxu0 0.0
    %445 = vmatprep.subr.mxu0 0.0
    %446 = vmatpush1.msra.mxu0 0.0
    %447 = vmatprep.subr.mxu0 0.0
    %448 = vmatpush1.msra.mxu0 0.0
    %449 = vmatprep.subr.mxu0 0.0
    %450 = vmatpush1.msra.mxu0 0.0
    %451 = vmatprep.subr.mxu0 0.0
    %452 = vmatpush1.msra.mxu0 0.0
    %453 = vmatprep.subr.mxu0 0.0
    %454 = vmatpush1.msra.mxu0 0.0
    %455 = vmatprep.mubr.f32.mxu0 0.0
    %456 = vmatmul.mubr.f32.gmra.mrb[0].mxu0 %v311
    %v457 = vpop.f32.mrb[0].mxu0
    %v458 = vadd.f32 %v389, %v457
    %v459 = vpop.f32.mrb[0].mxu0
    %460 = vdwg.mxu0
    %vm461 = vcmask 31744
    %v462 = vsel %vm461, %v380, -inf
    %463 = vmax.xlane.f32.xlu0 %v462
    %v464 = vpop.xlane.xlu0 %463
    %v465 = vsub.f32 %v380, %v464
    %v466 = vmul.f32 %v465, 1.442695
    %v467 = vpow.pop %v466
    %v468 = vsel %vm461, %v467, 0.0
    %469 = vadd.xlane.f32.xlu0 %v468
    %v470 = vpop.xlane.xlu0 %469
    %v471 = vrcp.pop %v470
    %v472 = vmul.f32 %v467, %v471
    %474 = vrot.lane.b32.xlu0 %v380, 4
    %v475 = vpop.permute.xlu0 %474
    %478 = vrot.lane.b32.xlu0 %v458, 8
    %v479 = vpop.permute.xlu0 %478
    %v481 = vsel %vm461, %v472, %v475
    %v482 = vsel %vm309, %v481, %v479
    %vm483 = vcmask 97280
    %484 = vst.msk [vmem:[#allocation2] sm:$0xff] %vm483, %v482
    // Predicated region
    $region46: #{tpu_custom_call.1} parent=1 // pred_check
      _
    $region47: #{tpu_custom_call.1} parent=1 // pred_check_branch
      %486 = sbr.rel (0) target = $region49
    $region48: #{tpu_custom_call.1} parent=1 // pred_region
      %s488 = ssub.s32 128, 128
      %489 = vsyncadd [#allocation3], %s488
      %s491 = sshll.u32 [#allocation2], 4
      %s492 = int_to_ptr.vmem [resolvable:$true] %s491
      %494 = dma.vmem_to_hbm [thread:$0]  %s492, 128, %s11, [#allocation3]
    $region49: #{tpu_custom_call.1} parent=1 // pred_fallthru
      _
    // Predicated region
    $region50: #{tpu_custom_call.1} parent=1 // pred_check
      _
    $region51: #{tpu_custom_call.1} parent=1 // pred_check_branch
      %496 = sbr.rel (0) target = $region53
    $region52: #{tpu_custom_call.1} parent=1 // pred_region
      %497 = dma.done [#allocation3], 128
    $region53: #{tpu_custom_call.1} parent=1 // pred_fallthru
      _
    %498 = vsyncpa [#allocation3], 1

</llo_original>
